<compile_context>
chip_gen: v6e
topology: v6e:2x2x1
jax: 0.10.0
libtpu: 0.0.40
codegen_flags: <defaults>
</compile_context>

<pallas_src>
import functools

import jax
import jax.numpy as jnp
from jax.experimental import pallas as pl
from jax.experimental.pallas import tpu as pltpu


# --------------------------------------------------------------------------- #
# Kernel
# --------------------------------------------------------------------------- #
def _layernorm_kernel(x_ref, w_ref, b_ref, o_ref, *, eps, d_true, d_pad):
    # x_ref: (tile_rows, d_pad), w_ref/b_ref: (1, d_pad), o_ref: (tile_rows, d_pad)
    x = x_ref[...].astype(jnp.float32)
    w = w_ref[...].astype(jnp.float32)
    b = b_ref[...].astype(jnp.float32)

    inv_d = jnp.float32(1.0 / d_true)

    # Zero-padded feature columns (if any) contribute 0 to the feature sum.
    mean = jnp.sum(x, axis=-1, keepdims=True) * inv_d          # (tile_rows, 1)
    xc = x - mean                                              # (tile_rows, d_pad)

    sumsq = jnp.sum(xc * xc, axis=-1, keepdims=True)           # (tile_rows, 1)
    if d_pad != d_true:
        # Each zero-padded column contributes exactly (0 - mean)^2 = mean^2.
        # Correct on the narrow column instead of a full-tile iota/where mask.
        sumsq = sumsq - jnp.float32(d_pad - d_true) * (mean * mean)
    var = sumsq * inv_d                                        # (tile_rows, 1)

    # Exact reciprocal on the narrow (tile_rows, 1) column.  approx=True is NOT
    # safe here: the error is amplified through 1/(var + 1e-12).
    inv = jnp.float32(1.0) / (var + jnp.float32(eps))          # (tile_rows, 1)

    # Matches torch: w * (x - mean) / (var + eps) + b   (note: NOT rsqrt)
    o_ref[...] = (xc * inv * w + b).astype(o_ref.dtype)


# --------------------------------------------------------------------------- #
# Tiling helpers
# --------------------------------------------------------------------------- #
_LANE = 128
_MAX_TILE_ROWS = 8192


def _round_up(x, m):
    return ((x + m - 1) // m) * m


def _cdiv(a, b):
    return (a + b - 1) // b


def _vmem_budget():
    """(tile_bytes_budget, vmem_limit_bytes), generation-aware when possible."""
    tile_budget = 24 * 1024 * 1024      # safe on v7x (64 MiB physical VMEM)
    vmem_limit = 48 * 1024 * 1024
    try:
        info = pltpu.get_tpu_info()
        cap = getattr(info, "vmem_capacity_bytes", None)
        if isinstance(cap, int) and cap >= 100 * 1024 * 1024:   # v5e/v6e: 128 MiB
            tile_budget = 48 * 1024 * 1024
            vmem_limit = 96 * 1024 * 1024
    except Exception:
        pass
    return tile_budget, vmem_limit


def _num_tensorcores():
    """Best-effort TensorCore-per-chip count; defaults to 1 (no forced split)."""
    try:
        info = pltpu.get_tpu_info()
        for attr in ("num_cores", "tensorcores_per_chip", "num_tensorcores",
                     "cores_per_chip"):
            v = getattr(info, attr, None)
            if isinstance(v, int) and v > 0:
                return v
    except Exception:
        pass
    try:
        v = getattr(jax.devices()[0], "num_cores", None)
        if isinstance(v, int) and v > 0:
            return v
    except Exception:
        pass
    return 1


def _choose_tile_rows(rows, d_pad, itemsize, sublane, tile_budget, num_cores):
    # 2 pipeline buffers for the input tile + 2 for the output tile (at itemsize),
    # plus ~3 fp32 tile-sized temporaries when compute upcasts a 2-byte dtype.
    per_row_bytes = 4 * d_pad * itemsize
    if itemsize < 4:
        per_row_bytes += 3 * d_pad * 4
    t = tile_budget // max(per_row_bytes, 1)
    t = min(t, _MAX_TILE_ROWS)

    rows_su = _round_up(rows, sublane)
    t = min(t, rows_su)

    # On multi-TensorCore chips (v7x), keep >= 2 grid steps per core so each core
    # still gets prefetch/writeback overlap.  On single-TC chips, never split.
    if num_cores >= 2 and rows_su >= 2 * num_cores * sublane:
        t = min(t, _round_up(_cdiv(rows_su, 2 * num_cores), sublane))

    t = max(sublane, (t // sublane) * sublane)
    return int(t)


# --------------------------------------------------------------------------- #
# Wrapper
# --------------------------------------------------------------------------- #
def layernorm(x, w, b, eps=1e-12, tile_rows=None):
    """x: (..., d_model); w, b: (d_model,). Returns same shape/dtype as x."""
    orig_shape = x.shape
    d = orig_shape[-1]
    x2 = x.reshape(-1, d)
    rows = x2.shape[0]

    itemsize = jnp.dtype(x.dtype).itemsize
    sublane = 16 if itemsize == 2 else 8   # bf16/fp16 pack 2 rows per sublane

    # Lane-dense feature axis: pad d to a multiple of 128 (only when needed).
    d_pad = _round_up(d, _LANE)

    tile_budget, vmem_limit = _vmem_budget()
    num_cores = _num_tensorcores()

    if tile_rows is None:
        tile_rows = _choose_tile_rows(rows, d_pad, itemsize, sublane,
                                      tile_budget, num_cores)
    tile_rows = max(sublane, _round_up(int(tile_rows), sublane))

    # Feature-axis padding only when d is not lane-aligned.  Rows are never padded:
    # the ragged last row-tile is handled by the BlockSpec pipeline (OOB reads are
    # row-local garbage, OOB writes are dropped), so no extra HBM passes.
    if d_pad != d:
        x2 = jnp.pad(x2, ((0, 0), (0, d_pad - d)))
        w2 = jnp.pad(w, (0, d_pad - d))
        b2 = jnp.pad(b, (0, d_pad - d))
    else:
        w2, b2 = w, b
    w2 = w2.reshape(1, d_pad)
    b2 = b2.reshape(1, d_pad)

    grid = (_cdiv(rows, tile_rows),)

    kernel = functools.partial(
        _layernorm_kernel, eps=float(eps), d_true=d, d_pad=d_pad
    )

    cost = pl.CostEstimate(
        flops=8 * rows * d_pad,
        transcendentals=0,
        bytes_accessed=2 * rows * d_pad * itemsize + 2 * d_pad * 4,
    )

    out = pl.pallas_call(
        kernel,
        out_shape=jax.ShapeDtypeStruct((rows, d_pad), x.dtype),
        grid_spec=pltpu.PrefetchScalarGridSpec(
            num_scalar_prefetch=0,
            grid=grid,
            in_specs=[
                pl.BlockSpec((tile_rows, d_pad), lambda i: (i, 0)),
                pl.BlockSpec((1, d_pad), lambda i: (0, 0)),   # resident, no re-DMA
                pl.BlockSpec((1, d_pad), lambda i: (0, 0)),
            ],
            out_specs=pl.BlockSpec((tile_rows, d_pad), lambda i: (i, 0)),
        ),
        compiler_params=pltpu.CompilerParams(
            dimension_semantics=("parallel",),
            vmem_limit_bytes=vmem_limit,
        ),
        cost_estimate=cost,
    )(x2, w2, b2)

    if d_pad != d:
        out = out[:, :d]
    return out.reshape(orig_shape)


# --------------------------------------------------------------------------- #
# Pure-JAX reference (matches the torch forward exactly)
# --------------------------------------------------------------------------- #
def layernorm_ref(x, w, b, eps=1e-12):
    x32 = x.astype(jnp.float32)
    mean = jnp.mean(x32, axis=-1, keepdims=True)
    xc = x32 - mean
    var = jnp.mean(xc * xc, axis=-1, keepdims=True)
    return (w * xc / (var + eps) + b).astype(x.dtype)


if __name__ == "__main__":
    key = jax.random.PRNGKey(0)

    # Main check: shapes implied by the module (batch, seq, d_model).
    batch, seq, d_model = 2, 8, 128
    x = jax.random.normal(key, (batch, seq, d_model), dtype=jnp.float32)
    w = jnp.ones((d_model,), dtype=jnp.float32)   # exactly the module __init__
    b = jnp.zeros((d_model,), dtype=jnp.float32)

    out = jax.block_until_ready(layernorm(x, w, b, eps=1e-12))
    ref = layernorm_ref(x, w, b, eps=1e-12)
    assert out.shape == x.shape and out.dtype == x.dtype
    assert jnp.allclose(out, ref, atol=1e-3, rtol=1e-3), "mismatch vs reference"

    # Secondary check: awkward feature size exercises the d-padding path.
    x2 = jax.random.normal(jax.random.PRNGKey(0), (3, 5, 96), dtype=jnp.float32)
    w2 = jnp.ones((96,), dtype=jnp.float32)
    b2 = jnp.zeros((96,), dtype=jnp.float32)
    out2 = jax.block_until_ready(layernorm(x2, w2, b2, eps=1e-12))
    ref2 = layernorm_ref(x2, w2, b2, eps=1e-12)
    assert out2.shape == x2.shape and out2.dtype == x2.dtype
    assert jnp.allclose(out2, ref2, atol=1e-3, rtol=1e-3), "mismatch (d-padded case)"

    # Third check: rows not a multiple of tile_rows exercises the ragged last
    # row-tile (no host-side row padding, no output row slice).
    x3 = jax.random.normal(jax.random.PRNGKey(0), (2, 37, 128), dtype=jnp.float32)
    out3 = jax.block_until_ready(layernorm(x3, w, b, eps=1e-12, tile_rows=32))
    ref3 = layernorm_ref(x3, w, b, eps=1e-12)
    assert out3.shape == x3.shape and out3.dtype == x3.dtype
    assert jnp.allclose(out3, ref3, atol=1e-3, rtol=1e-3), "mismatch (ragged rows)"

    print("KERNEL_OK")
</pallas_src>

<mosaic_0001>
module attributes {stable_mosaic.version = 11 : i64} {
  func.func @_layernorm_kernel(%arg0: i32, %arg1: memref<16x128xf32, #tpu.memory_space<vmem>>, %arg2: memref<1x128xf32, #tpu.memory_space<vmem>>, %arg3: memref<1x128xf32, #tpu.memory_space<vmem>>, %arg4: memref<16x128xf32, #tpu.memory_space<vmem>>) attributes {dimension_semantics = [#tpu.dimension_semantics<parallel>], iteration_bounds = array<i64: 1>, scalar_prefetch = 0 : i64, scratch_operands = 0 : i64, tpu.core_type = #tpu.core_type<tc>, window_params = [{transform_indices = @transform_0, window_bounds = array<i64: 16, 128>}, {pipeline_mode = #tpu.pipeline_mode<synchronous>, transform_indices = @transform_1, window_bounds = array<i64: 1, 128>}, {pipeline_mode = #tpu.pipeline_mode<synchronous>, transform_indices = @transform_2, window_bounds = array<i64: 1, 128>}, {transform_indices = @transform_3, window_bounds = array<i64: 16, 128>}]} {
    %c0 = arith.constant 0 : index
    %c0_0 = arith.constant 0 : index
    %0 = vector.load %arg1[%c0, %c0_0] : memref<16x128xf32, #tpu.memory_space<vmem>>, vector<16x128xf32>
    %c0_1 = arith.constant 0 : index
    %c0_2 = arith.constant 0 : index
    %1 = vector.load %arg2[%c0_1, %c0_2] : memref<1x128xf32, #tpu.memory_space<vmem>>, vector<1x128xf32>
    %c0_3 = arith.constant 0 : index
    %c0_4 = arith.constant 0 : index
    %2 = vector.load %arg3[%c0_3, %c0_4] : memref<1x128xf32, #tpu.memory_space<vmem>>, vector<1x128xf32>
    %cst = arith.constant dense<0.000000e+00> : vector<16xf32>
    %3 = vector.multi_reduction <add>, %0, %cst [1] : vector<16x128xf32> to vector<16xf32>
    %4 = vector.shape_cast %3 : vector<16xf32> to vector<16x1xf32>
    %cst_5 = arith.constant 7.812500e-03 : f32
    %5 = vector.broadcast %cst_5 : f32 to vector<16x1xf32>
    %6 = arith.mulf %4, %5 : vector<16x1xf32>
    %7 = vector.broadcast %6 : vector<16x1xf32> to vector<16x128xf32>
    %8 = arith.subf %0, %7 : vector<16x128xf32>
    %9 = arith.mulf %8, %8 : vector<16x128xf32>
    %cst_6 = arith.constant dense<0.000000e+00> : vector<16xf32>
    %10 = vector.multi_reduction <add>, %9, %cst_6 [1] : vector<16x128xf32> to vector<16xf32>
    %11 = vector.shape_cast %10 : vector<16xf32> to vector<16x1xf32>
    %cst_7 = arith.constant 7.812500e-03 : f32
    %12 = vector.broadcast %cst_7 : f32 to vector<16x1xf32>
    %13 = arith.mulf %11, %12 : vector<16x1xf32>
    %cst_8 = arith.constant 9.99999996E-13 : f32
    %14 = vector.broadcast %cst_8 : f32 to vector<16x1xf32>
    %15 = arith.addf %13, %14 : vector<16x1xf32>
    %cst_9 = arith.constant 1.000000e+00 : f32
    %16 = vector.broadcast %cst_9 : f32 to vector<16x1xf32>
    %17 = arith.divf %16, %15 : vector<16x1xf32>
    %18 = vector.broadcast %17 : vector<16x1xf32> to vector<16x128xf32>
    %19 = arith.mulf %8, %18 : vector<16x128xf32>
    %20 = vector.broadcast %1 : vector<1x128xf32> to vector<16x128xf32>
    %21 = arith.mulf %19, %20 : vector<16x128xf32>
    %22 = vector.broadcast %2 : vector<1x128xf32> to vector<16x128xf32>
    %23 = arith.addf %21, %22 : vector<16x128xf32>
    %c0_10 = arith.constant 0 : index
    %c0_11 = arith.constant 0 : index
    %24 = vector.load %arg4[%c0_10, %c0_11] : memref<16x128xf32, #tpu.memory_space<vmem>>, vector<16x128xf32>
    tpu.vector_store %arg4[%c0_10, %c0_11], %23 {strides = array<i32>} : memref<16x128xf32, #tpu.memory_space<vmem>>, vector<16x128xf32>,
    return
  }
  func.func @transform_0(%arg0: i32) -> (i32, i32) {
    %c0_i32 = arith.constant 0 : i32
    %c0_i32_0 = arith.constant 0 : i32
    return %arg0, %c0_i32 : i32, i32
  }
  func.func @transform_1(%arg0: i32) -> (i32, i32) {
    %c0_i32 = arith.constant 0 : i32
    %c0_i32_0 = arith.constant 0 : i32
    %c0_i32_1 = arith.constant 0 : i32
    return %c0_i32, %c0_i32_0 : i32, i32
  }
  func.func @transform_2(%arg0: i32) -> (i32, i32) {
    %c0_i32 = arith.constant 0 : i32
    %c0_i32_0 = arith.constant 0 : i32
    %c0_i32_1 = arith.constant 0 : i32
    return %c0_i32, %c0_i32_0 : i32, i32
  }
  func.func @transform_3(%arg0: i32) -> (i32, i32) {
    %c0_i32 = arith.constant 0 : i32
    %c0_i32_0 = arith.constant 0 : i32
    return %arg0, %c0_i32 : i32, i32
  }
}

</mosaic_0001>

<llo_original>
// kernel: tpu_custom_call.1
$region0: #{tpu_custom_call.1}
  #allocation0 [shape = 'u32[]', space=smem, size = 0x4, offset = 0x4, fixed_abs, tag = 'smem constant byte address 0x4 - core index']
  #allocation1 [shape = 'u32[144,128]{1,0:T(1,128)}', space=vmem, size = 0x12000, scoped, tag = 'internal scratch']
  %s0 = inlined_call_operand.hbm [shape: f32[16,128], index: 0, kind: input, shape index: {}]
  %s1 = inlined_call_operand.vmem [shape: f32[1,128], index: 1, kind: input, shape index: {}]
  %s2 = inlined_call_operand.vmem [shape: f32[1,128], index: 2, kind: input, shape index: {}]
  %s3 = inlined_call_operand.hbm [shape: f32[16,128], index: 3, kind: output, shape index: {}]
  %s4 = sld [smem:[#allocation0]]
  $region26: #{tpu_custom_call.1} parent=0
    _
  %s6 = ssub.s32 1, %s4
  %s7 = scalar_select 0, %s6, %s4
  $region1: #{tpu_custom_call.1} parent=0
    #allocation2 [shape = 'u8[8192]{0}', space=vmem, size = 0x2000, scoped, tag = 'input window, operand 0, single buffered']
    #allocation3 [shape = 's32[1]{0}', space=sflag, size = 0x4, scoped, tag = 'scoped memory for tpu_custom_call.1']
    #allocation4 [shape = 's32[1]{0}', space=sflag, size = 0x4, scoped, tag = 'scoped memory for tpu_custom_call.1']
    #allocation5 [shape = 'u8[8192]{0}', space=vmem, size = 0x2000, scoped, tag = 'output window, operand 0, single buffered']
    %8 = vsyncpa [#allocation3], 0
    %9 = vsyncpa [#allocation4], 0
    // Predicated region
    $region2: #{tpu_custom_call.1} parent=1 // pred_check
      _
    $region3: #{tpu_custom_call.1} parent=1 // pred_check_branch
      %11 = sbr.rel (0) target = $region5
    $region4: #{tpu_custom_call.1} parent=1 // pred_region
      %s13 = ssub.s32 256, 256
      %14 = vsyncadd [#allocation3], %s13
      %s15 = sshll.u32 [#allocation2], 4
      %s16 = int_to_ptr.vmem [resolvable:$true] %s15
      %21 = dma.hbm_to_vmem [thread:$0]  %s0, 256, %s16, [#allocation3], 128, 128, 8
    $region5: #{tpu_custom_call.1} parent=1 // pred_fallthru
      _
    // Predicated region
    $region6: #{tpu_custom_call.1} parent=1 // pred_check
      _
    $region7: #{tpu_custom_call.1} parent=1 // pred_check_branch
      %23 = sbr.rel (0) target = $region9
    $region8: #{tpu_custom_call.1} parent=1 // pred_region
      _
    $region9: #{tpu_custom_call.1} parent=1 // pred_fallthru
      _
    // Predicated region
    $region10: #{tpu_custom_call.1} parent=1 // pred_check
      _
    $region11: #{tpu_custom_call.1} parent=1 // pred_check_branch
      %25 = sbr.rel (0) target = $region13
    $region12: #{tpu_custom_call.1} parent=1 // pred_region
      _
    $region13: #{tpu_custom_call.1} parent=1 // pred_fallthru
      _
    // Predicated region
    $region14: #{tpu_custom_call.1} parent=1 // pred_check
      _
    $region15: #{tpu_custom_call.1} parent=1 // pred_check_branch
      %27 = sbr.rel (0) target = $region17
    $region16: #{tpu_custom_call.1} parent=1 // pred_region
      %28 = dma.done [#allocation3], 256
    $region17: #{tpu_custom_call.1} parent=1 // pred_fallthru
      _
    %v29 = vld [vmem:[#allocation2] sm:$0xff]
    %v30 = vld [vmem:[#allocation2 + $0x8] sm:$0xff]
    %v31 = vld [vmem:[%s1] sm:$0x1]
    %v32 = vld [vmem:[%s2] sm:$0x1]
    %33 = vadd.xlane.f32.xlu0 %v29
    %v34 = vpop.xlane.xlu0 %33
    %35 = vadd.xlane.f32.xlu0 %v30
    %v36 = vpop.xlane.xlu0 %35
    %v37 = vmul.f32 %v34, 0.0078125
    %v38 = vmul.f32 %v36, 0.0078125
    %v39 = vsub.f32 %v29, %v37
    %v40 = vsub.f32 %v30, %v38
    %v41 = vmul.f32 %v39, %v39
    %v42 = vmul.f32 %v40, %v40
    %43 = vadd.xlane.f32.xlu0 %v41
    %v44 = vpop.xlane.xlu0 %43
    %45 = vadd.xlane.f32.xlu0 %v42
    %v46 = vpop.xlane.xlu0 %45
    %v47 = vmul.f32 %v44, 0.0078125
    %v48 = vmul.f32 %v46, 0.0078125
    %v49 = vadd.f32 %v47, 1e-12
    %v50 = vadd.f32 %v48, 1e-12
    %v51 = vrcp.pop %v49
    %v52 = vmul.f32 1.0, %v51
    %v53 = vrcp.pop %v50
    %v54 = vmul.f32 1.0, %v53
    %v55 = vmul.f32 %v39, %v52
    %v56 = vmul.f32 %v40, %v54
    %v58 = vlaneseq
    %v59 = vshrl.u32 %v58, 7
    %v60 = vsub.s32 0, %v59
    %v61 = vrot.slane %v31, %v60
    %v63 = vmul.f32 %v55, %v61
    %v64 = vmul.f32 %v56, %v61
    %v66 = vlaneseq
    %v67 = vshrl.u32 %v66, 7
    %v68 = vsub.s32 0, %v67
    %v69 = vrot.slane %v32, %v68
    %v71 = vadd.f32 %v63, %v69
    %v72 = vadd.f32 %v64, %v69
    %73 = vst [vmem:[#allocation5] sm:$0xff] %v71
    %74 = vst [vmem:[#allocation5 + $0x8] sm:$0xff] %v72
    // Predicated region
    $region18: #{tpu_custom_call.1} parent=1 // pred_check
      _
    $region19: #{tpu_custom_call.1} parent=1 // pred_check_branch
      %76 = sbr.rel (0) target = $region21
    $region20: #{tpu_custom_call.1} parent=1 // pred_region
      %s78 = ssub.s32 256, 256
      %79 = vsyncadd [#allocation4], %s78
      %s80 = sshll.u32 [#allocation5], 4
      %s81 = int_to_ptr.vmem [resolvable:$true] %s80
      %86 = dma.vmem_to_hbm [thread:$0]  %s81, 256, %s3, [#allocation4], 128, 128, 8
    $region21: #{tpu_custom_call.1} parent=1 // pred_fallthru
      _
    // Predicated region
    $region22: #{tpu_custom_call.1} parent=1 // pred_check
      _
    $region23: #{tpu_custom_call.1} parent=1 // pred_check_branch
      %88 = sbr.rel (0) target = $region25
    $region24: #{tpu_custom_call.1} parent=1 // pred_region
      %89 = dma.done [#allocation4], 256
    $region25: #{tpu_custom_call.1} parent=1 // pred_fallthru
      _
    %90 = vsyncpa [#allocation3], 1
    %91 = vsyncpa [#allocation4], 1

</llo_original>
